<compile_context>
chip_gen: v5e
topology: v5e:2x2
jax: 0.10.0
libtpu: 0.0.40
codegen_flags: <defaults>
</compile_context>

<pallas_src>
import functools

import jax
import jax.numpy as jnp
from jax.experimental import pallas as pl
from jax.experimental.pallas import tpu as pltpu


def _residual_linear_kernel(x_ref, w_ref, b_ref, o_ref):
    """o = (x @ W + b) + x for one (tm, D_pad) row-tile of x (f32 accumulate)."""
    x = x_ref[...]                                            # (tm, D_pad), f32 or bf16
    xf = x if x.dtype == jnp.float32 else x.astype(jnp.float32)
    y = jnp.dot(x, w_ref[...], preferred_element_type=jnp.float32)  # MXU, f32 acc
    y = y + b_ref[...] + xf                                   # bias broadcast + residual, f32
    o_ref[...] = y.astype(o_ref.dtype)


def _round_up(v, m):
    return (v + m - 1) // m * m


@functools.partial(jax.jit, static_argnames=("tm", "io_dtype"))
def residual_linear(x, w, b, *, tm=512, io_dtype=None):
    """Pallas implementation of Residual(Linear(D, D)).forward(x).

    x: (B, N, D)   w: (D, D)   b: (D,)    returns (B, N, D) == x @ w + b + x
    io_dtype: optional narrower dtype (e.g. jnp.bfloat16) for x/W HBM traffic;
              accumulation and the residual add stay in f32.
    """
    B, N, D = x.shape
    out_dtype = x.dtype
    M = B * N

    # Lane-dense padding: last dim maps to the 128-wide lane axis.
    D_pad = _round_up(D, 128)

    in_dtype = io_dtype if io_dtype is not None else x.dtype
    in_bytes = jnp.dtype(in_dtype).itemsize
    out_bytes = jnp.dtype(out_dtype).itemsize

    # Row tile: as large as possible up to `tm` (multiple of 8 sublanes), then
    # clamped so the VMEM footprint stays <= ~40 MiB (safe on v7x's 64 MiB).
    tm_eff = _round_up(min(tm, _round_up(M, 8)), 8)

    def vmem_bytes(t):
        return (2 * t * D_pad * in_bytes        # x, double-buffered
                + 2 * t * D_pad * out_bytes     # out, double-buffered
                + D_pad * D_pad * in_bytes      # weight, single-buffered (resident)
                + 2 * D_pad * 4)                # bias

    budget = 40 * 1024 * 1024
    while tm_eff > 8 and vmem_bytes(tm_eff) > budget:
        tm_eff = max(8, _round_up(tm_eff // 2, 8))
    # TODO(synk): for very large D (f32 D >= ~2048) the resident (D, D) weight
    # itself exceeds the budget; grid-tile its output dim (grid=(M//tm, D//tn)).

    M_pad = _round_up(M, tm_eff)

    x2 = x.reshape(M, D)
    w2 = w
    if io_dtype is not None:
        x2 = x2.astype(io_dtype)
        w2 = w2.astype(io_dtype)
    x2 = jnp.pad(x2, ((0, M_pad - M), (0, D_pad - D)))
    w2 = jnp.pad(w2, ((0, D_pad - D), (0, D_pad - D)))
    b2 = jnp.pad(b.astype(jnp.float32), (0, D_pad - D)).reshape(1, D_pad)

    grid = (M_pad // tm_eff,)
    flops = 2 * M_pad * D_pad * D_pad + 2 * M_pad * D_pad
    bytes_accessed = (M_pad * D_pad * in_bytes        # x read
                      + D_pad * D_pad * in_bytes      # weight read (once)
                      + D_pad * 4                     # bias read
                      + M_pad * D_pad * out_bytes)    # output write
    vmem_limit = int(max(vmem_bytes(tm_eff) + 8 * 1024 * 1024, 32 * 1024 * 1024))

    out = pl.pallas_call(
        _residual_linear_kernel,
        out_shape=jax.ShapeDtypeStruct((M_pad, D_pad), out_dtype),
        grid_spec=pltpu.PrefetchScalarGridSpec(
            num_scalar_prefetch=0,
            grid=grid,
            in_specs=[
                pl.BlockSpec((tm_eff, D_pad), lambda i: (i, 0)),      # x row-tile
                pl.BlockSpec((D_pad, D_pad), lambda i: (0, 0),        # full weight,
                             pipeline_mode=pl.Buffered(buffer_count=1)),  # resident, 1 buf
                pl.BlockSpec((1, D_pad), lambda i: (0, 0)),           # bias, resident
            ],
            out_specs=pl.BlockSpec((tm_eff, D_pad), lambda i: (i, 0)),
        ),
        compiler_params=pltpu.CompilerParams(
            dimension_semantics=("parallel",),      # shard row tiles across TCs (v7x)
            vmem_limit_bytes=vmem_limit,
        ),
        cost_estimate=pl.CostEstimate(
            flops=flops, transcendentals=0, bytes_accessed=bytes_accessed),
    )(x2, w2, b2)

    return out[:M, :D].reshape(B, N, D)


if __name__ == "__main__":
    # Small ViT-ish shapes: batch=2, tokens=8, hidden=32
    B, N, D = 2, 8, 32

    key = jax.random.PRNGKey(0)
    kx, kw, kb = jax.random.split(key, 3)

    x = jax.random.normal(kx, (B, N, D), dtype=jnp.float32)
    # Deterministic init for the wrapped fn (Linear(D, D)), roughly matching
    # nn.Linear's uniform(-1/sqrt(D), 1/sqrt(D)).
    bound = 1.0 / (D ** 0.5)
    w = jax.random.uniform(kw, (D, D), jnp.float32, -bound, bound)
    b = jax.random.uniform(kb, (D,), jnp.float32, -bound, bound)

    # Reference: Residual(fn).forward(x) == fn(x) + x
    ref = jnp.einsum("bnd,de->bne", x, w) + b + x

    # f32 path
    out = jax.block_until_ready(residual_linear(x, w, b))
    assert out.shape == (B, N, D)
    assert jnp.allclose(out, ref, atol=1e-5, rtol=1e-5), "f32 mismatch vs reference"

    # bf16-I/O path (memory-bound on v6e/v7x: halves x/W HBM bytes, f32 accumulate)
    out_bf16 = jax.block_until_ready(residual_linear(x, w, b, io_dtype=jnp.bfloat16))
    assert out_bf16.shape == (B, N, D)
    assert jnp.allclose(out_bf16, ref, atol=0.1, rtol=0.1), "bf16 mismatch vs reference"

    print("KERNEL_OK")
</pallas_src>

<mosaic_0001>
module attributes {stable_mosaic.version = 11 : i64} {
  func.func @_residual_linear_kernel(%arg0: i32, %arg1: memref<16x128xf32, #tpu.memory_space<vmem>>, %arg2: memref<128x128xf32, #tpu.memory_space<vmem>>, %arg3: memref<1x128xf32, #tpu.memory_space<vmem>>, %arg4: memref<16x128xf32, #tpu.memory_space<vmem>>) attributes {dimension_semantics = [#tpu.dimension_semantics<parallel>], iteration_bounds = array<i64: 1>, scalar_prefetch = 0 : i64, scratch_operands = 0 : i64, tpu.core_type = #tpu.core_type<tc>, window_params = [{transform_indices = @transform_0, window_bounds = array<i64: 16, 128>}, {pipeline_mode = #tpu.pipeline_mode<synchronous>, transform_indices = @transform_1, window_bounds = array<i64: 128, 128>}, {pipeline_mode = #tpu.pipeline_mode<synchronous>, transform_indices = @transform_2, window_bounds = array<i64: 1, 128>}, {transform_indices = @transform_3, window_bounds = array<i64: 16, 128>}]} {
    %c0 = arith.constant 0 : index
    %c0_0 = arith.constant 0 : index
    %0 = vector.load %arg1[%c0, %c0_0] : memref<16x128xf32, #tpu.memory_space<vmem>>, vector<16x128xf32>
    %c0_1 = arith.constant 0 : index
    %c0_2 = arith.constant 0 : index
    %1 = vector.load %arg2[%c0_1, %c0_2] : memref<128x128xf32, #tpu.memory_space<vmem>>, vector<128x128xf32>
    %cst = arith.constant dense<0.000000e+00> : vector<16x128xf32>
    %2 = tpu.matmul %0, %1, %cst {dimension_numbers = #tpu.dot_dimension_numbers<[1], [0], [0], [1], [0, 0, 1, 1], [], []>} : vector<16x128xf32>, vector<128x128xf32>, vector<16x128xf32> -> vector<16x128xf32>
    %c0_3 = arith.constant 0 : index
    %c0_4 = arith.constant 0 : index
    %3 = vector.load %arg3[%c0_3, %c0_4] : memref<1x128xf32, #tpu.memory_space<vmem>>, vector<1x128xf32>
    %4 = vector.broadcast %3 : vector<1x128xf32> to vector<16x128xf32>
    %5 = arith.addf %2, %4 : vector<16x128xf32>
    %6 = arith.addf %5, %0 : vector<16x128xf32>
    %c0_5 = arith.constant 0 : index
    %c0_6 = arith.constant 0 : index
    %7 = vector.load %arg4[%c0_5, %c0_6] : memref<16x128xf32, #tpu.memory_space<vmem>>, vector<16x128xf32>
    tpu.vector_store %arg4[%c0_5, %c0_6], %6 {strides = array<i32>} : memref<16x128xf32, #tpu.memory_space<vmem>>, vector<16x128xf32>,
    return
  }
  func.func @transform_0(%arg0: i32) -> (i32, i32) {
    %c0_i32 = arith.constant 0 : i32
    %c0_i32_0 = arith.constant 0 : i32
    return %arg0, %c0_i32 : i32, i32
  }
  func.func @transform_1(%arg0: i32) -> (i32, i32) {
    %c0_i32 = arith.constant 0 : i32
    %c0_i32_0 = arith.constant 0 : i32
    %c0_i32_1 = arith.constant 0 : i32
    return %c0_i32, %c0_i32_0 : i32, i32
  }
  func.func @transform_2(%arg0: i32) -> (i32, i32) {
    %c0_i32 = arith.constant 0 : i32
    %c0_i32_0 = arith.constant 0 : i32
    %c0_i32_1 = arith.constant 0 : i32
    return %c0_i32, %c0_i32_0 : i32, i32
  }
  func.func @transform_3(%arg0: i32) -> (i32, i32) {
    %c0_i32 = arith.constant 0 : i32
    %c0_i32_0 = arith.constant 0 : i32
    return %arg0, %c0_i32 : i32, i32
  }
}

</mosaic_0001>

<llo_original>
// kernel: residual_linear.1
$region0: #{residual_linear.1}
  #allocation0 [shape = 'u32[]', space=smem, size = 0x4, offset = 0x4, fixed_abs, tag = 'smem constant byte address 0x4 - core index']
  #allocation1 [shape = 'u32[72,128]{1,0:T(1,128)}', space=vmem, size = 0x9000, scoped, tag = 'internal scratch']
  %s0 = inlined_call_operand.vmem [shape: f32[16,128], index: 0, kind: input, shape index: {}]
  %s1 = inlined_call_operand.vmem [shape: f32[128,128], index: 1, kind: input, shape index: {}]
  %s2 = inlined_call_operand.vmem [shape: f32[1,128], index: 2, kind: input, shape index: {}]
  %s3 = inlined_call_operand.vmem [shape: f32[16,128], index: 3, kind: output, shape index: {}]
  %s4 = sld [smem:[#allocation0]]
  $region22: #{residual_linear.1} parent=0
    _
  %s6 = ssub.s32 1, %s4
  %s7 = scalar_select 0, %s6, %s4
  // Predicated region
  $region2: #{residual_linear.1} parent=0 // pred_check
    _
  $region3: #{residual_linear.1} parent=0 // pred_check_branch
    %9 = sbr.rel (0) target = $region5
  $region4: #{residual_linear.1} parent=0 // pred_region
    _
  $region5: #{residual_linear.1} parent=0 // pred_fallthru
    _
  // Predicated region
  $region6: #{residual_linear.1} parent=0 // pred_check
    _
  $region7: #{residual_linear.1} parent=0 // pred_check_branch
    %11 = sbr.rel (0) target = $region9
  $region8: #{residual_linear.1} parent=0 // pred_region
    _
  $region9: #{residual_linear.1} parent=0 // pred_fallthru
    _
  // Predicated region
  $region10: #{residual_linear.1} parent=0 // pred_check
    _
  $region11: #{residual_linear.1} parent=0 // pred_check_branch
    %13 = sbr.rel (0) target = $region13
  $region12: #{residual_linear.1} parent=0 // pred_region
    _
  $region13: #{residual_linear.1} parent=0 // pred_fallthru
    _
  %v14 = vld [vmem:[%s0] sm:$0xff]
  %v15 = vld [vmem:[%s0 + $0x8] sm:$0xff]
  %v16 = vld [vmem:[%s1] sm:$0xff]
  %v17 = vld [vmem:[%s1 + $0x8] sm:$0xff]
  %v18 = vld [vmem:[%s1 + $0x10] sm:$0xff]
  %v19 = vld [vmem:[%s1 + $0x18] sm:$0xff]
  %v20 = vld [vmem:[%s1 + $0x20] sm:$0xff]
  %v21 = vld [vmem:[%s1 + $0x28] sm:$0xff]
  %v22 = vld [vmem:[%s1 + $0x30] sm:$0xff]
  %v23 = vld [vmem:[%s1 + $0x38] sm:$0xff]
  %v24 = vld [vmem:[%s1 + $0x40] sm:$0xff]
  %v25 = vld [vmem:[%s1 + $0x48] sm:$0xff]
  %v26 = vld [vmem:[%s1 + $0x50] sm:$0xff]
  %v27 = vld [vmem:[%s1 + $0x58] sm:$0xff]
  %v28 = vld [vmem:[%s1 + $0x60] sm:$0xff]
  %v29 = vld [vmem:[%s1 + $0x68] sm:$0xff]
  %v30 = vld [vmem:[%s1 + $0x70] sm:$0xff]
  %v31 = vld [vmem:[%s1 + $0x78] sm:$0xff]
  %v32 = vld [vmem:[%s2] sm:$0x1]
  %v34 = vperm.slane %v32, 0
  %36 = vmatpush.msra.mxu0 %v31
  %37 = vmatpush.msra.mxu0 %v30
  %38 = vmatpush.msra.mxu0 %v29
  %39 = vmatpush.msra.mxu0 %v28
  %40 = vmatpush.msra.mxu0 %v27
  %41 = vmatpush.msra.mxu0 %v26
  %42 = vmatpush.msra.mxu0 %v25
  %43 = vmatpush.msra.mxu0 %v24
  %44 = vmatpush.msra.mxu0 %v23
  %45 = vmatpush.msra.mxu0 %v22
  %46 = vmatpush.msra.mxu0 %v21
  %47 = vmatpush.msra.mxu0 %v20
  %48 = vmatpush.msra.mxu0 %v19
  %49 = vmatpush.msra.mxu0 %v18
  %50 = vmatpush.msra.mxu0 %v17
  %51 = vmatpush.msra.mxu0 %v16
  %52 = vmatmul.f32.gmra.mxu0 %v14
  %v53 = vpop.f32.mrf.mxu0
  %v54 = vadd.f32 %v34, %v53
  %55 = vmatmul.f32.gmra.mxu0 %v15
  %v56 = vpop.f32.mrf.mxu0
  %v57 = vadd.f32 %v34, %v56
  %58 = vdwg.mxu0
  %v59 = vadd.f32 %v54, %v14
  %v60 = vadd.f32 %v57, %v15
  %61 = vst [vmem:[%s3] sm:$0xff] %v59
  %62 = vst [vmem:[%s3 + $0x8] sm:$0xff] %v60
  // Predicated region
  $region14: #{residual_linear.1} parent=0 // pred_check
    _
  $region15: #{residual_linear.1} parent=0 // pred_check_branch
    %64 = sbr.rel (0) target = $region17
  $region16: #{residual_linear.1} parent=0 // pred_region
    _
  $region17: #{residual_linear.1} parent=0 // pred_fallthru
    _
  // Predicated region
  $region18: #{residual_linear.1} parent=0 // pred_check
    _
  $region19: #{residual_linear.1} parent=0 // pred_check_branch
    %66 = sbr.rel (0) target = $region21
  $region20: #{residual_linear.1} parent=0 // pred_region
    _
  $region21: #{residual_linear.1} parent=0 // pred_fallthru
    _

</llo_original>
